<compile_context>
chip_gen: v7x
topology: tpu7x:2x2x1
jax: 0.10.0
libtpu: 0.0.40
codegen_flags: <defaults>
</compile_context>

<pallas_src>
import functools

import numpy as np
import jax
import jax.numpy as jnp
from jax import lax
from jax.experimental import pallas as pl
from jax.experimental.pallas import tpu as pltpu

CONF_THRES = 0.25
IOU_THRES = 0.45
MAX_WH = 4096.0       # per-class coordinate offset (yolov5 trick for class-aware NMS)
MAX_DET = 128         # output slots per image (== N here, so nothing is truncated)
IMG_PER_BLOCK = 8     # images packed on the sublane axis per grid step


# --------------------------------- kernel ------------------------------------
def _nms_kernel(x_ref, o_ref, *, conf_thres, iou_thres, max_det, max_wh):
    # x_ref: (C, IPB, N)      channels x images(sublanes) x boxes(lanes),
    #                         channels = [cx, cy, w, h, obj, cls_0 .. cls_{nc-1}]
    # o_ref: (6, IPB, MAX_DET) fields [x1,y1,x2,y2,conf,cls] x images x detection slots
    c_total, ipb, n = x_ref.shape
    nc = c_total - 5

    cx = x_ref[0]
    cy = x_ref[1]
    w = x_ref[2]
    h = x_ref[3]
    obj = x_ref[4]                                            # (IPB, N)

    # conf = obj * cls ; best class per box (first index on ties, like torch.max).
    # Unrolled over classes (nc is static) — keeps everything 2-D and register-light.
    conf = x_ref[5] * obj
    cls_id = jnp.zeros_like(conf)
    for k in range(1, nc):
        ck = x_ref[5 + k] * obj
        better = ck > conf
        cls_id = jnp.where(better, float(k), cls_id)
        conf = jnp.where(better, ck, conf)

    # xywh -> xyxy
    x1 = cx - w * 0.5
    y1 = cy - h * 0.5
    x2 = cx + w * 0.5
    y2 = cy + h * 0.5

    # class-offset boxes (different classes never overlap) + areas — loop invariant
    off = cls_id * max_wh
    ox1, oy1, ox2, oy2 = x1 + off, y1 + off, x2 + off, y2 + off
    area = (ox2 - ox1) * (oy2 - oy1)                          # (IPB, N)

    valid = jnp.logical_and(obj > conf_thres, conf > conf_thres)     # candidate filter
    scores0 = jnp.where(valid, conf, -1.0)                    # (IPB, N)
    m0 = jnp.max(scores0, axis=-1, keepdims=True)             # (IPB, 1) carried per-image max

    lane = lax.broadcasted_iota(jnp.int32, (ipb, n), 1)       # box index on lanes
    slot = lax.broadcasted_iota(jnp.int32, (1, max_det), 1)   # detection slot on lanes
    zeros_det = jnp.zeros((ipb, max_det), jnp.float32)

    # loop-invariant gather slab: every per-box field the loop needs to pick
    fields = jnp.stack([x1, y1, x2, y2, cls_id, area], axis=0)       # (6, IPB, N)

    def cond(carry):
        t, active = carry[0], carry[1]
        return jnp.logical_and(t < max_det, active)

    def body(carry):
        t, _, scores, m, ax1, ay1, ax2, ay2, aconf, acls = carry

        keep = m > 0.0                                        # (IPB,1) image still active
        # argmax index (first lane on ties), using the carried per-image max m
        idx = jnp.min(jnp.where(scores >= m, lane, n), axis=-1, keepdims=True)
        sel = lane == idx                                     # (IPB, N) one-hot per image

        # one stacked one-hot gather for all six picked fields
        picks = jnp.sum(jnp.where(sel[None], fields, 0.0), axis=-1, keepdims=True)
        sx1, sy1, sx2, sy2 = picks[0], picks[1], picks[2], picks[3]   # (IPB, 1)
        scl, s_area = picks[4], picks[5]

        soff = scl * max_wh
        sox1, soy1 = sx1 + soff, sy1 + soff
        sox2, soy2 = sx2 + soff, sy2 + soff

        # IoU row of picked (offset) box vs all (offset) boxes — divide-free threshold
        iw = jnp.maximum(jnp.minimum(ox2, sox2) - jnp.maximum(ox1, sox1), 0.0)
        ih = jnp.maximum(jnp.minimum(oy2, soy2) - jnp.maximum(oy1, soy1), 0.0)
        inter = iw * ih
        overlap = inter > iou_thres * (area + s_area - inter + 1e-9)

        # record detection slot t for every still-active image (zeros otherwise)
        keep_f = jnp.where(keep, 1.0, 0.0)                    # (IPB, 1)
        here = slot == t                                      # (1, max_det)
        ax1 = ax1 + jnp.where(here, sx1 * keep_f, zeros_det)
        ay1 = ay1 + jnp.where(here, sy1 * keep_f, zeros_det)
        ax2 = ax2 + jnp.where(here, sx2 * keep_f, zeros_det)
        ay2 = ay2 + jnp.where(here, sy2 * keep_f, zeros_det)
        aconf = aconf + jnp.where(here, m * keep_f, zeros_det)
        acls = acls + jnp.where(here, scl * keep_f, zeros_det)

        # suppress the picked box and everything it overlaps (class-aware via offsets)
        suppress = jnp.logical_or(sel, jnp.logical_and(keep, overlap))
        scores = jnp.where(suppress, -1.0, scores)
        m_next = jnp.max(scores, axis=-1, keepdims=True)
        active = jnp.max(m_next) > 0.0                        # any image still has candidates
        return (t + 1, active, scores, m_next, ax1, ay1, ax2, ay2, aconf, acls)

    init = (jnp.int32(0), jnp.max(m0) > 0.0, scores0, m0) + (zeros_det,) * 6
    carry = lax.while_loop(cond, body, init)
    ax1, ay1, ax2, ay2, aconf, acls = carry[4:]

    # six full, unmasked (IPB, MAX_DET) stores — lane-dense output slab
    o_ref[0] = ax1
    o_ref[1] = ay1
    o_ref[2] = ax2
    o_ref[3] = ay2
    o_ref[4] = aconf
    o_ref[5] = acls


# -------------------------------- wrapper -------------------------------------
def non_max_suppression(prediction, conf_thres=CONF_THRES, iou_thres=IOU_THRES,
                        max_det=MAX_DET):
    """Pallas port of utils.general.non_max_suppression (classes=None, agnostic=False,
    best-class-per-box). Returns (B, max_det, 6) rows [x1,y1,x2,y2,conf,cls], zero-padded."""
    B, N, C = prediction.shape
    ipb = IMG_PER_BLOCK
    b_pad = ((B + ipb - 1) // ipb) * ipb

    # layout plumbing in the wrapper: channels leading, images on sublanes, boxes on lanes
    xt = jnp.transpose(prediction.astype(jnp.float32), (2, 0, 1))    # (C, B, N)
    if b_pad != B:
        xt = jnp.pad(xt, ((0, 0), (0, b_pad - B), (0, 0)))           # zero images: no candidates

    kernel = functools.partial(
        _nms_kernel,
        conf_thres=float(conf_thres),
        iou_thres=float(iou_thres),
        max_det=int(max_det),
        max_wh=MAX_WH,
    )

    out = pl.pallas_call(
        kernel,
        out_shape=jax.ShapeDtypeStruct((6, b_pad, max_det), jnp.float32),
        grid_spec=pltpu.PrefetchScalarGridSpec(
            num_scalar_prefetch=0,
            grid=(b_pad // ipb,),
            in_specs=[pl.BlockSpec((C, ipb, N), lambda g: (0, g, 0))],
            out_specs=pl.BlockSpec((6, ipb, max_det), lambda g: (0, g, 0)),
        ),
        compiler_params=pltpu.CompilerParams(
            dimension_semantics=("parallel",),   # blocks of 8 images shard across TCs (B >= 16)
        ),
    )(xt)

    # (6, B_pad, max_det) field-major slab -> (B, max_det, 6) detection rows
    return jnp.transpose(out, (1, 2, 0))[:B]


class NMS:
    """Pallas-TPU equivalent of models.common.NMS (YOLOv5)."""
    conf = 0.25
    iou = 0.45
    classes = None   # class filtering unused (None in the reference module)

    def __call__(self, x):
        return non_max_suppression(x[0], conf_thres=self.conf, iou_thres=self.iou)

    forward = __call__


# ------------------------- reference (NumPy greedy NMS) ------------------------
def nms_reference(pred, conf_thres, iou_thres, max_det, max_wh=MAX_WH):
    pred = np.asarray(pred, dtype=np.float32)
    B, N, C = pred.shape
    out = np.zeros((B, max_det, 6), dtype=np.float32)
    for b in range(B):
        p = pred[b]
        obj = p[:, 4]
        conf_all = p[:, 5:] * obj[:, None]
        conf = conf_all.max(axis=1)
        cls_id = conf_all.argmax(axis=1).astype(np.float32)
        cx, cy, w, h = p[:, 0], p[:, 1], p[:, 2], p[:, 3]
        x1 = cx - w * np.float32(0.5); y1 = cy - h * np.float32(0.5)
        x2 = cx + w * np.float32(0.5); y2 = cy + h * np.float32(0.5)
        off = cls_id * np.float32(max_wh)
        ox1, oy1, ox2, oy2 = x1 + off, y1 + off, x2 + off, y2 + off
        area = (ox2 - ox1) * (oy2 - oy1)
        valid = (obj > np.float32(conf_thres)) & (conf > np.float32(conf_thres))
        scores = np.where(valid, conf, np.float32(-1.0)).astype(np.float32)
        k = 0
        for _ in range(max_det):
            i = int(np.argmax(scores))
            if scores[i] <= 0.0:
                break
            out[b, k] = (x1[i], y1[i], x2[i], y2[i], scores[i], cls_id[i])
            k += 1
            soff = cls_id[i] * np.float32(max_wh)
            sox1, soy1 = x1[i] + soff, y1[i] + soff
            sox2, soy2 = x2[i] + soff, y2[i] + soff
            s_area = (sox2 - sox1) * (soy2 - soy1)
            iw = np.maximum(np.minimum(ox2, sox2) - np.maximum(ox1, sox1), 0.0)
            ih = np.maximum(np.minimum(oy2, soy2) - np.maximum(oy1, soy1), 0.0)
            inter = iw * ih
            iou = inter / (area + s_area - inter + np.float32(1e-9))
            scores = np.where(iou > np.float32(iou_thres), np.float32(-1.0), scores)
            scores[i] = -1.0
    return out


# ----------------------------------- main --------------------------------------
if __name__ == "__main__":
    B, N, NC = 2, 128, 16          # batch, boxes, classes -> prediction (B, N, 5 + NC)
    key = jax.random.PRNGKey(0)
    kxy, kwh, kobj, kcls = jax.random.split(key, 4)

    xy = jax.random.uniform(kxy, (B, N, 2), minval=0.0, maxval=640.0)
    wh = jax.random.uniform(kwh, (B, N, 2), minval=8.0, maxval=128.0)
    obj = jax.random.uniform(kobj, (B, N, 1))
    cls = jax.random.uniform(kcls, (B, N, NC))
    pred = jnp.concatenate([xy, wh, obj, cls], axis=-1).astype(jnp.float32)

    model = NMS()
    x = (pred,)                    # Detect-head style tuple; NMS consumes x[0]
    det = jax.block_until_ready(model(x))

    ref = nms_reference(np.asarray(pred), NMS.conf, NMS.iou, MAX_DET)

    assert det.shape == (B, MAX_DET, 6), det.shape
    np.testing.assert_allclose(np.asarray(det), ref, atol=1e-3, rtol=1e-3)

    print("KERNEL_OK")
</pallas_src>

<mosaic_0001>
module attributes {stable_mosaic.version = 11 : i64} {
  func.func @_nms_kernel(%arg0: i32, %arg1: memref<21x8x128xf32, #tpu.memory_space<vmem>>, %arg2: memref<6x8x128xf32, #tpu.memory_space<vmem>>) attributes {dimension_semantics = [#tpu.dimension_semantics<parallel>], iteration_bounds = array<i64: 1>, scalar_prefetch = 0 : i64, scratch_operands = 0 : i64, tpu.core_type = #tpu.core_type<tc>, window_params = [{transform_indices = @transform_0, window_bounds = array<i64: 21, 8, 128>}, {transform_indices = @transform_1, window_bounds = array<i64: 6, 8, 128>}]} {
    %c0 = arith.constant 0 : index
    %c0_0 = arith.constant 0 : index
    %c0_1 = arith.constant 0 : index
    %0 = vector.load %arg1[%c0, %c0_0, %c0_1] : memref<21x8x128xf32, #tpu.memory_space<vmem>>, vector<1x8x128xf32>
    %1 = vector.shape_cast %0 : vector<1x8x128xf32> to vector<8x128xf32>
    %c1 = arith.constant 1 : index
    %c0_2 = arith.constant 0 : index
    %c0_3 = arith.constant 0 : index
    %2 = vector.load %arg1[%c1, %c0_2, %c0_3] : memref<21x8x128xf32, #tpu.memory_space<vmem>>, vector<1x8x128xf32>
    %3 = vector.shape_cast %2 : vector<1x8x128xf32> to vector<8x128xf32>
    %c2 = arith.constant 2 : index
    %c0_4 = arith.constant 0 : index
    %c0_5 = arith.constant 0 : index
    %4 = vector.load %arg1[%c2, %c0_4, %c0_5] : memref<21x8x128xf32, #tpu.memory_space<vmem>>, vector<1x8x128xf32>
    %5 = vector.shape_cast %4 : vector<1x8x128xf32> to vector<8x128xf32>
    %c3 = arith.constant 3 : index
    %c0_6 = arith.constant 0 : index
    %c0_7 = arith.constant 0 : index
    %6 = vector.load %arg1[%c3, %c0_6, %c0_7] : memref<21x8x128xf32, #tpu.memory_space<vmem>>, vector<1x8x128xf32>
    %7 = vector.shape_cast %6 : vector<1x8x128xf32> to vector<8x128xf32>
    %c4 = arith.constant 4 : index
    %c0_8 = arith.constant 0 : index
    %c0_9 = arith.constant 0 : index
    %8 = vector.load %arg1[%c4, %c0_8, %c0_9] : memref<21x8x128xf32, #tpu.memory_space<vmem>>, vector<1x8x128xf32>
    %9 = vector.shape_cast %8 : vector<1x8x128xf32> to vector<8x128xf32>
    %c5 = arith.constant 5 : index
    %c0_10 = arith.constant 0 : index
    %c0_11 = arith.constant 0 : index
    %10 = vector.load %arg1[%c5, %c0_10, %c0_11] : memref<21x8x128xf32, #tpu.memory_space<vmem>>, vector<1x8x128xf32>
    %11 = vector.shape_cast %10 : vector<1x8x128xf32> to vector<8x128xf32>
    %12 = arith.mulf %11, %9 : vector<8x128xf32>
    %cst = arith.constant 0.000000e+00 : f32
    %13 = vector.broadcast %cst : f32 to vector<8x128xf32>
    %c6 = arith.constant 6 : index
    %c0_12 = arith.constant 0 : index
    %c0_13 = arith.constant 0 : index
    %14 = vector.load %arg1[%c6, %c0_12, %c0_13] : memref<21x8x128xf32, #tpu.memory_space<vmem>>, vector<1x8x128xf32>
    %15 = vector.shape_cast %14 : vector<1x8x128xf32> to vector<8x128xf32>
    %16 = arith.mulf %15, %9 : vector<8x128xf32>
    %17 = arith.cmpf ogt, %16, %12 : vector<8x128xf32>
    %cst_14 = arith.constant 1.000000e+00 : f32
    %18 = vector.broadcast %cst_14 : f32 to vector<8x128xf32>
    %19 = arith.select %17, %18, %13 : vector<8x128xi1>, vector<8x128xf32>
    %20 = arith.select %17, %16, %12 : vector<8x128xi1>, vector<8x128xf32>
    %c7 = arith.constant 7 : index
    %c0_15 = arith.constant 0 : index
    %c0_16 = arith.constant 0 : index
    %21 = vector.load %arg1[%c7, %c0_15, %c0_16] : memref<21x8x128xf32, #tpu.memory_space<vmem>>, vector<1x8x128xf32>
    %22 = vector.shape_cast %21 : vector<1x8x128xf32> to vector<8x128xf32>
    %23 = arith.mulf %22, %9 : vector<8x128xf32>
    %24 = arith.cmpf ogt, %23, %20 : vector<8x128xf32>
    %cst_17 = arith.constant 2.000000e+00 : f32
    %25 = vector.broadcast %cst_17 : f32 to vector<8x128xf32>
    %26 = arith.select %24, %25, %19 : vector<8x128xi1>, vector<8x128xf32>
    %27 = arith.select %24, %23, %20 : vector<8x128xi1>, vector<8x128xf32>
    %c8 = arith.constant 8 : index
    %c0_18 = arith.constant 0 : index
    %c0_19 = arith.constant 0 : index
    %28 = vector.load %arg1[%c8, %c0_18, %c0_19] : memref<21x8x128xf32, #tpu.memory_space<vmem>>, vector<1x8x128xf32>
    %29 = vector.shape_cast %28 : vector<1x8x128xf32> to vector<8x128xf32>
    %30 = arith.mulf %29, %9 : vector<8x128xf32>
    %31 = arith.cmpf ogt, %30, %27 : vector<8x128xf32>
    %cst_20 = arith.constant 3.000000e+00 : f32
    %32 = vector.broadcast %cst_20 : f32 to vector<8x128xf32>
    %33 = arith.select %31, %32, %26 : vector<8x128xi1>, vector<8x128xf32>
    %34 = arith.select %31, %30, %27 : vector<8x128xi1>, vector<8x128xf32>
    %c9 = arith.constant 9 : index
    %c0_21 = arith.constant 0 : index
    %c0_22 = arith.constant 0 : index
    %35 = vector.load %arg1[%c9, %c0_21, %c0_22] : memref<21x8x128xf32, #tpu.memory_space<vmem>>, vector<1x8x128xf32>
    %36 = vector.shape_cast %35 : vector<1x8x128xf32> to vector<8x128xf32>
    %37 = arith.mulf %36, %9 : vector<8x128xf32>
    %38 = arith.cmpf ogt, %37, %34 : vector<8x128xf32>
    %cst_23 = arith.constant 4.000000e+00 : f32
    %39 = vector.broadcast %cst_23 : f32 to vector<8x128xf32>
    %40 = arith.select %38, %39, %33 : vector<8x128xi1>, vector<8x128xf32>
    %41 = arith.select %38, %37, %34 : vector<8x128xi1>, vector<8x128xf32>
    %c10 = arith.constant 10 : index
    %c0_24 = arith.constant 0 : index
    %c0_25 = arith.constant 0 : index
    %42 = vector.load %arg1[%c10, %c0_24, %c0_25] : memref<21x8x128xf32, #tpu.memory_space<vmem>>, vector<1x8x128xf32>
    %43 = vector.shape_cast %42 : vector<1x8x128xf32> to vector<8x128xf32>
    %44 = arith.mulf %43, %9 : vector<8x128xf32>
    %45 = arith.cmpf ogt, %44, %41 : vector<8x128xf32>
    %cst_26 = arith.constant 5.000000e+00 : f32
    %46 = vector.broadcast %cst_26 : f32 to vector<8x128xf32>
    %47 = arith.select %45, %46, %40 : vector<8x128xi1>, vector<8x128xf32>
    %48 = arith.select %45, %44, %41 : vector<8x128xi1>, vector<8x128xf32>
    %c11 = arith.constant 11 : index
    %c0_27 = arith.constant 0 : index
    %c0_28 = arith.constant 0 : index
    %49 = vector.load %arg1[%c11, %c0_27, %c0_28] : memref<21x8x128xf32, #tpu.memory_space<vmem>>, vector<1x8x128xf32>
    %50 = vector.shape_cast %49 : vector<1x8x128xf32> to vector<8x128xf32>
    %51 = arith.mulf %50, %9 : vector<8x128xf32>
    %52 = arith.cmpf ogt, %51, %48 : vector<8x128xf32>
    %cst_29 = arith.constant 6.000000e+00 : f32
    %53 = vector.broadcast %cst_29 : f32 to vector<8x128xf32>
    %54 = arith.select %52, %53, %47 : vector<8x128xi1>, vector<8x128xf32>
    %55 = arith.select %52, %51, %48 : vector<8x128xi1>, vector<8x128xf32>
    %c12 = arith.constant 12 : index
    %c0_30 = arith.constant 0 : index
    %c0_31 = arith.constant 0 : index
    %56 = vector.load %arg1[%c12, %c0_30, %c0_31] : memref<21x8x128xf32, #tpu.memory_space<vmem>>, vector<1x8x128xf32>
    %57 = vector.shape_cast %56 : vector<1x8x128xf32> to vector<8x128xf32>
    %58 = arith.mulf %57, %9 : vector<8x128xf32>
    %59 = arith.cmpf ogt, %58, %55 : vector<8x128xf32>
    %cst_32 = arith.constant 7.000000e+00 : f32
    %60 = vector.broadcast %cst_32 : f32 to vector<8x128xf32>
    %61 = arith.select %59, %60, %54 : vector<8x128xi1>, vector<8x128xf32>
    %62 = arith.select %59, %58, %55 : vector<8x128xi1>, vector<8x128xf32>
    %c13 = arith.constant 13 : index
    %c0_33 = arith.constant 0 : index
    %c0_34 = arith.constant 0 : index
    %63 = vector.load %arg1[%c13, %c0_33, %c0_34] : memref<21x8x128xf32, #tpu.memory_space<vmem>>, vector<1x8x128xf32>
    %64 = vector.shape_cast %63 : vector<1x8x128xf32> to vector<8x128xf32>
    %65 = arith.mulf %64, %9 : vector<8x128xf32>
    %66 = arith.cmpf ogt, %65, %62 : vector<8x128xf32>
    %cst_35 = arith.constant 8.000000e+00 : f32
    %67 = vector.broadcast %cst_35 : f32 to vector<8x128xf32>
    %68 = arith.select %66, %67, %61 : vector<8x128xi1>, vector<8x128xf32>
    %69 = arith.select %66, %65, %62 : vector<8x128xi1>, vector<8x128xf32>
    %c14 = arith.constant 14 : index
    %c0_36 = arith.constant 0 : index
    %c0_37 = arith.constant 0 : index
    %70 = vector.load %arg1[%c14, %c0_36, %c0_37] : memref<21x8x128xf32, #tpu.memory_space<vmem>>, vector<1x8x128xf32>
    %71 = vector.shape_cast %70 : vector<1x8x128xf32> to vector<8x128xf32>
    %72 = arith.mulf %71, %9 : vector<8x128xf32>
    %73 = arith.cmpf ogt, %72, %69 : vector<8x128xf32>
    %cst_38 = arith.constant 9.000000e+00 : f32
    %74 = vector.broadcast %cst_38 : f32 to vector<8x128xf32>
    %75 = arith.select %73, %74, %68 : vector<8x128xi1>, vector<8x128xf32>
    %76 = arith.select %73, %72, %69 : vector<8x128xi1>, vector<8x128xf32>
    %c15 = arith.constant 15 : index
    %c0_39 = arith.constant 0 : index
    %c0_40 = arith.constant 0 : index
    %77 = vector.load %arg1[%c15, %c0_39, %c0_40] : memref<21x8x128xf32, #tpu.memory_space<vmem>>, vector<1x8x128xf32>
    %78 = vector.shape_cast %77 : vector<1x8x128xf32> to vector<8x128xf32>
    %79 = arith.mulf %78, %9 : vector<8x128xf32>
    %80 = arith.cmpf ogt, %79, %76 : vector<8x128xf32>
    %cst_41 = arith.constant 1.000000e+01 : f32
    %81 = vector.broadcast %cst_41 : f32 to vector<8x128xf32>
    %82 = arith.select %80, %81, %75 : vector<8x128xi1>, vector<8x128xf32>
    %83 = arith.select %80, %79, %76 : vector<8x128xi1>, vector<8x128xf32>
    %c16 = arith.constant 16 : index
    %c0_42 = arith.constant 0 : index
    %c0_43 = arith.constant 0 : index
    %84 = vector.load %arg1[%c16, %c0_42, %c0_43] : memref<21x8x128xf32, #tpu.memory_space<vmem>>, vector<1x8x128xf32>
    %85 = vector.shape_cast %84 : vector<1x8x128xf32> to vector<8x128xf32>
    %86 = arith.mulf %85, %9 : vector<8x128xf32>
    %87 = arith.cmpf ogt, %86, %83 : vector<8x128xf32>
    %cst_44 = arith.constant 1.100000e+01 : f32
    %88 = vector.broadcast %cst_44 : f32 to vector<8x128xf32>
    %89 = arith.select %87, %88, %82 : vector<8x128xi1>, vector<8x128xf32>
    %90 = arith.select %87, %86, %83 : vector<8x128xi1>, vector<8x128xf32>
    %c17 = arith.constant 17 : index
    %c0_45 = arith.constant 0 : index
    %c0_46 = arith.constant 0 : index
    %91 = vector.load %arg1[%c17, %c0_45, %c0_46] : memref<21x8x128xf32, #tpu.memory_space<vmem>>, vector<1x8x128xf32>
    %92 = vector.shape_cast %91 : vector<1x8x128xf32> to vector<8x128xf32>
    %93 = arith.mulf %92, %9 : vector<8x128xf32>
    %94 = arith.cmpf ogt, %93, %90 : vector<8x128xf32>
    %cst_47 = arith.constant 1.200000e+01 : f32
    %95 = vector.broadcast %cst_47 : f32 to vector<8x128xf32>
    %96 = arith.select %94, %95, %89 : vector<8x128xi1>, vector<8x128xf32>
    %97 = arith.select %94, %93, %90 : vector<8x128xi1>, vector<8x128xf32>
    %c18 = arith.constant 18 : index
    %c0_48 = arith.constant 0 : index
    %c0_49 = arith.constant 0 : index
    %98 = vector.load %arg1[%c18, %c0_48, %c0_49] : memref<21x8x128xf32, #tpu.memory_space<vmem>>, vector<1x8x128xf32>
    %99 = vector.shape_cast %98 : vector<1x8x128xf32> to vector<8x128xf32>
    %100 = arith.mulf %99, %9 : vector<8x128xf32>
    %101 = arith.cmpf ogt, %100, %97 : vector<8x128xf32>
    %cst_50 = arith.constant 1.300000e+01 : f32
    %102 = vector.broadcast %cst_50 : f32 to vector<8x128xf32>
    %103 = arith.select %101, %102, %96 : vector<8x128xi1>, vector<8x128xf32>
    %104 = arith.select %101, %100, %97 : vector<8x128xi1>, vector<8x128xf32>
    %c19 = arith.constant 19 : index
    %c0_51 = arith.constant 0 : index
    %c0_52 = arith.constant 0 : index
    %105 = vector.load %arg1[%c19, %c0_51, %c0_52] : memref<21x8x128xf32, #tpu.memory_space<vmem>>, vector<1x8x128xf32>
    %106 = vector.shape_cast %105 : vector<1x8x128xf32> to vector<8x128xf32>
    %107 = arith.mulf %106, %9 : vector<8x128xf32>
    %108 = arith.cmpf ogt, %107, %104 : vector<8x128xf32>
    %cst_53 = arith.constant 1.400000e+01 : f32
    %109 = vector.broadcast %cst_53 : f32 to vector<8x128xf32>
    %110 = arith.select %108, %109, %103 : vector<8x128xi1>, vector<8x128xf32>
    %111 = arith.select %108, %107, %104 : vector<8x128xi1>, vector<8x128xf32>
    %c20 = arith.constant 20 : index
    %c0_54 = arith.constant 0 : index
    %c0_55 = arith.constant 0 : index
    %112 = vector.load %arg1[%c20, %c0_54, %c0_55] : memref<21x8x128xf32, #tpu.memory_space<vmem>>, vector<1x8x128xf32>
    %113 = vector.shape_cast %112 : vector<1x8x128xf32> to vector<8x128xf32>
    %114 = arith.mulf %113, %9 : vector<8x128xf32>
    %115 = arith.cmpf ogt, %114, %111 : vector<8x128xf32>
    %cst_56 = arith.constant 1.500000e+01 : f32
    %116 = vector.broadcast %cst_56 : f32 to vector<8x128xf32>
    %117 = arith.select %115, %116, %110 : vector<8x128xi1>, vector<8x128xf32>
    %118 = arith.select %115, %114, %111 : vector<8x128xi1>, vector<8x128xf32>
    %cst_57 = arith.constant 5.000000e-01 : f32
    %119 = vector.broadcast %cst_57 : f32 to vector<8x128xf32>
    %120 = arith.mulf %5, %119 : vector<8x128xf32>
    %121 = arith.subf %1, %120 : vector<8x128xf32>
    %cst_58 = arith.constant 5.000000e-01 : f32
    %122 = vector.broadcast %cst_58 : f32 to vector<8x128xf32>
    %123 = arith.mulf %7, %122 : vector<8x128xf32>
    %124 = arith.subf %3, %123 : vector<8x128xf32>
    %cst_59 = arith.constant 5.000000e-01 : f32
    %125 = vector.broadcast %cst_59 : f32 to vector<8x128xf32>
    %126 = arith.mulf %5, %125 : vector<8x128xf32>
    %127 = arith.addf %1, %126 : vector<8x128xf32>
    %cst_60 = arith.constant 5.000000e-01 : f32
    %128 = vector.broadcast %cst_60 : f32 to vector<8x128xf32>
    %129 = arith.mulf %7, %128 : vector<8x128xf32>
    %130 = arith.addf %3, %129 : vector<8x128xf32>
    %cst_61 = arith.constant 4.096000e+03 : f32
    %131 = vector.broadcast %cst_61 : f32 to vector<8x128xf32>
    %132 = arith.mulf %117, %131 : vector<8x128xf32>
    %133 = arith.addf %121, %132 : vector<8x128xf32>
    %134 = arith.addf %124, %132 : vector<8x128xf32>
    %135 = arith.addf %127, %132 : vector<8x128xf32>
    %136 = arith.addf %130, %132 : vector<8x128xf32>
    %137 = arith.subf %135, %133 : vector<8x128xf32>
    %138 = arith.subf %136, %134 : vector<8x128xf32>
    %139 = arith.mulf %137, %138 : vector<8x128xf32>
    %cst_62 = arith.constant 2.500000e-01 : f32
    %140 = vector.broadcast %cst_62 : f32 to vector<8x128xf32>
    %141 = arith.cmpf ogt, %9, %140 : vector<8x128xf32>
    %cst_63 = arith.constant 2.500000e-01 : f32
    %142 = vector.broadcast %cst_63 : f32 to vector<8x128xf32>
    %143 = arith.cmpf ogt, %118, %142 : vector<8x128xf32>
    %144 = arith.andi %141, %143 : vector<8x128xi1>
    %cst_64 = arith.constant -1.000000e+00 : f32
    %145 = vector.broadcast %cst_64 : f32 to vector<8x128xf32>
    %146 = arith.select %144, %118, %145 : vector<8x128xi1>, vector<8x128xf32>
    %cst_65 = arith.constant dense<0xFF800000> : vector<8xf32>
    %147 = vector.multi_reduction <maximumf>, %146, %cst_65 [1] : vector<8x128xf32> to vector<8xf32>
    %148 = vector.shape_cast %147 : vector<8xf32> to vector<8x1xf32>
    %149 = tpu.iota {dimensions = array<i32: 1>} : vector<8x128xi32>
    %150 = tpu.iota {dimensions = array<i32: 1>} : vector<1x128xi32>
    %cst_66 = arith.constant 0.000000e+00 : f32
    %151 = vector.broadcast %cst_66 : f32 to vector<8x128xf32>
    %152 = vector.shape_cast %121 : vector<8x128xf32> to vector<1x8x128xf32>
    %153 = vector.shape_cast %124 : vector<8x128xf32> to vector<1x8x128xf32>
    %154 = vector.shape_cast %127 : vector<8x128xf32> to vector<1x8x128xf32>
    %155 = vector.shape_cast %130 : vector<8x128xf32> to vector<1x8x128xf32>
    %156 = vector.shape_cast %117 : vector<8x128xf32> to vector<1x8x128xf32>
    %157 = vector.shape_cast %139 : vector<8x128xf32> to vector<1x8x128xf32>
    %158 = tpu.concatenate %152, %153, %154, %155, %156, %157 in 0 : vector<1x8x128xf32>, vector<1x8x128xf32>, vector<1x8x128xf32>, vector<1x8x128xf32>, vector<1x8x128xf32>, vector<1x8x128xf32> -> vector<6x8x128xf32>
    %159 = vector.shape_cast %148 : vector<8x1xf32> to vector<1x8x1xf32>
    %cst_67 = arith.constant dense<0xFF800000> : vector<1xf32>
    %160 = vector.multi_reduction <maximumf>, %159, %cst_67 [1, 2] : vector<1x8x1xf32> to vector<1xf32>
    %161 = vector.shape_cast %160 : vector<1xf32> to vector<1x1x1xf32>
    %162 = vector.extract %161[0, 0, 0] : f32 from vector<1x1x1xf32>
    %cst_68 = arith.constant 0.000000e+00 : f32
    %163 = arith.cmpf ogt, %162, %cst_68 : f32
    %c0_i32 = arith.constant 0 : i32
    %164:10 = scf.while (%arg3 = %c0_i32, %arg4 = %163, %arg5 = %146, %arg6 = %148, %arg7 = %151, %arg8 = %151, %arg9 = %151, %arg10 = %151, %arg11 = %151, %arg12 = %151) : (i32, i1, vector<8x128xf32>, vector<8x1xf32>, vector<8x128xf32>, vector<8x128xf32>, vector<8x128xf32>, vector<8x128xf32>, vector<8x128xf32>, vector<8x128xf32>) -> (i32, i1, vector<8x128xf32>, vector<8x1xf32>, vector<8x128xf32>, vector<8x128xf32>, vector<8x128xf32>, vector<8x128xf32>, vector<8x128xf32>, vector<8x128xf32>) {
      %c128_i32 = arith.constant 128 : i32
      %183 = arith.cmpi slt, %arg3, %c128_i32 : i32
      %184 = arith.andi %183, %arg4 : i1
      scf.condition(%184) %arg3, %arg4, %arg5, %arg6, %arg7, %arg8, %arg9, %arg10, %arg11, %arg12 : i32, i1, vector<8x128xf32>, vector<8x1xf32>, vector<8x128xf32>, vector<8x128xf32>, vector<8x128xf32>, vector<8x128xf32>, vector<8x128xf32>, vector<8x128xf32>
    } do {
    ^bb0(%arg3: i32, %arg4: i1, %arg5: vector<8x128xf32>, %arg6: vector<8x1xf32>, %arg7: vector<8x128xf32>, %arg8: vector<8x128xf32>, %arg9: vector<8x128xf32>, %arg10: vector<8x128xf32>, %arg11: vector<8x128xf32>, %arg12: vector<8x128xf32>):
      %cst_87 = arith.constant 0.000000e+00 : f32
      %183 = vector.broadcast %cst_87 : f32 to vector<8x1xf32>
      %184 = arith.cmpf ogt, %arg6, %183 : vector<8x1xf32>
      %185 = vector.broadcast %arg6 : vector<8x1xf32> to vector<8x128xf32>
      %186 = arith.cmpf oge, %arg5, %185 : vector<8x128xf32>
      %c128_i32 = arith.constant 128 : i32
      %187 = vector.broadcast %c128_i32 : i32 to vector<8x128xi32>
      %188 = arith.select %186, %149, %187 : vector<8x128xi1>, vector<8x128xi32>
      %cst_88 = arith.constant dense<2147483647> : vector<8xi32>
      %189 = vector.multi_reduction <minsi>, %188, %cst_88 [1] : vector<8x128xi32> to vector<8xi32>
      %190 = vector.shape_cast %189 : vector<8xi32> to vector<8x1xi32>
      %191 = vector.broadcast %190 : vector<8x1xi32> to vector<8x128xi32>
      %192 = arith.cmpi eq, %149, %191 : vector<8x128xi32>
      %193 = vector.shape_cast %192 : vector<8x128xi1> to vector<1x8x128xi1>
      %cst_89 = arith.constant 0.000000e+00 : f32
      %194 = vector.shape_cast %193 : vector<1x8x128xi1> to vector<1x8x128xi1>
      %195 = vector.broadcast %194 : vector<1x8x128xi1> to vector<6x8x128xi1>
      %196 = vector.broadcast %cst_89 : f32 to vector<6x8x128xf32>
      %197 = arith.select %195, %158, %196 : vector<6x8x128xi1>, vector<6x8x128xf32>
      %cst_90 = arith.constant dense<0.000000e+00> : vector<6x8xf32>
      %198 = vector.multi_reduction <add>, %197, %cst_90 [2] : vector<6x8x128xf32> to vector<6x8xf32>
      %199 = vector.shape_cast %198 : vector<6x8xf32> to vector<6x8x1xf32>
      %200 = vector.extract_strided_slice %199 {offsets = [0, 0, 0], sizes = [1, 8, 1], strides = [1, 1, 1]} : vector<6x8x1xf32> to vector<1x8x1xf32>
      %201 = vector.shape_cast %200 : vector<1x8x1xf32> to vector<8x1xf32>
      %202 = vector.extract_strided_slice %199 {offsets = [1, 0, 0], sizes = [1, 8, 1], strides = [1, 1, 1]} : vector<6x8x1xf32> to vector<1x8x1xf32>
      %203 = vector.shape_cast %202 : vector<1x8x1xf32> to vector<8x1xf32>
      %204 = vector.extract_strided_slice %199 {offsets = [2, 0, 0], sizes = [1, 8, 1], strides = [1, 1, 1]} : vector<6x8x1xf32> to vector<1x8x1xf32>
      %205 = vector.shape_cast %204 : vector<1x8x1xf32> to vector<8x1xf32>
      %206 = vector.extract_strided_slice %199 {offsets = [3, 0, 0], sizes = [1, 8, 1], strides = [1, 1, 1]} : vector<6x8x1xf32> to vector<1x8x1xf32>
      %207 = vector.shape_cast %206 : vector<1x8x1xf32> to vector<8x1xf32>
      %208 = vector.extract_strided_slice %199 {offsets = [4, 0, 0], sizes = [1, 8, 1], strides = [1, 1, 1]} : vector<6x8x1xf32> to vector<1x8x1xf32>
      %209 = vector.shape_cast %208 : vector<1x8x1xf32> to vector<8x1xf32>
      %210 = vector.extract_strided_slice %199 {offsets = [5, 0, 0], sizes = [1, 8, 1], strides = [1, 1, 1]} : vector<6x8x1xf32> to vector<1x8x1xf32>
      %211 = vector.shape_cast %210 : vector<1x8x1xf32> to vector<8x1xf32>
      %cst_91 = arith.constant 4.096000e+03 : f32
      %212 = vector.broadcast %cst_91 : f32 to vector<8x1xf32>
      %213 = arith.mulf %209, %212 : vector<8x1xf32>
      %214 = arith.addf %201, %213 : vector<8x1xf32>
      %215 = arith.addf %203, %213 : vector<8x1xf32>
      %216 = arith.addf %205, %213 : vector<8x1xf32>
      %217 = arith.addf %207, %213 : vector<8x1xf32>
      %218 = vector.broadcast %216 : vector<8x1xf32> to vector<8x128xf32>
      %219 = arith.minimumf %135, %218 : vector<8x128xf32>
      %220 = vector.broadcast %214 : vector<8x1xf32> to vector<8x128xf32>
      %221 = arith.maximumf %133, %220 : vector<8x128xf32>
      %222 = arith.subf %219, %221 : vector<8x128xf32>
      %cst_92 = arith.constant 0.000000e+00 : f32
      %223 = vector.broadcast %cst_92 : f32 to vector<8x128xf32>
      %224 = arith.maximumf %222, %223 : vector<8x128xf32>
      %225 = vector.broadcast %217 : vector<8x1xf32> to vector<8x128xf32>
      %226 = arith.minimumf %136, %225 : vector<8x128xf32>
      %227 = vector.broadcast %215 : vector<8x1xf32> to vector<8x128xf32>
      %228 = arith.maximumf %134, %227 : vector<8x128xf32>
      %229 = arith.subf %226, %228 : vector<8x128xf32>
      %cst_93 = arith.constant 0.000000e+00 : f32
      %230 = vector.broadcast %cst_93 : f32 to vector<8x128xf32>
      %231 = arith.maximumf %229, %230 : vector<8x128xf32>
      %232 = arith.mulf %224, %231 : vector<8x128xf32>
      %233 = vector.broadcast %211 : vector<8x1xf32> to vector<8x128xf32>
      %234 = arith.addf %139, %233 : vector<8x128xf32>
      %235 = arith.subf %234, %232 : vector<8x128xf32>
      %cst_94 = arith.constant 9.99999971E-10 : f32
      %236 = vector.broadcast %cst_94 : f32 to vector<8x128xf32>
      %237 = arith.addf %235, %236 : vector<8x128xf32>
      %cst_95 = arith.constant 4.500000e-01 : f32
      %238 = vector.broadcast %cst_95 : f32 to vector<8x128xf32>
      %239 = arith.mulf %238, %237 : vector<8x128xf32>
      %240 = arith.cmpf ogt, %232, %239 : vector<8x128xf32>
      %cst_96 = arith.constant 1.000000e+00 : f32
      %cst_97 = arith.constant 0.000000e+00 : f32
      %241 = vector.broadcast %cst_96 : f32 to vector<8x1xf32>
      %242 = vector.broadcast %cst_97 : f32 to vector<8x1xf32>
      %243 = arith.select %184, %241, %242 : vector<8x1xi1>, vector<8x1xf32>
      %244 = vector.broadcast %arg3 : i32 to vector<1x128xi32>
      %245 = arith.cmpi eq, %150, %244 : vector<1x128xi32>
      %246 = arith.mulf %201, %243 : vector<8x1xf32>
      %247 = vector.shape_cast %245 : vector<1x128xi1> to vector<1x128xi1>
      %248 = vector.broadcast %247 : vector<1x128xi1> to vector<8x128xi1>
      %249 = vector.shape_cast %246 : vector<8x1xf32> to vector<8x1xf32>
      %250 = vector.broadcast %249 : vector<8x1xf32> to vector<8x128xf32>
      %251 = arith.select %248, %250, %151 : vector<8x128xi1>, vector<8x128xf32>
      %252 = arith.addf %arg7, %251 : vector<8x128xf32>
      %253 = arith.mulf %203, %243 : vector<8x1xf32>
      %254 = vector.shape_cast %245 : vector<1x128xi1> to vector<1x128xi1>
      %255 = vector.broadcast %254 : vector<1x128xi1> to vector<8x128xi1>
      %256 = vector.shape_cast %253 : vector<8x1xf32> to vector<8x1xf32>
      %257 = vector.broadcast %256 : vector<8x1xf32> to vector<8x128xf32>
      %258 = arith.select %255, %257, %151 : vector<8x128xi1>, vector<8x128xf32>
      %259 = arith.addf %arg8, %258 : vector<8x128xf32>
      %260 = arith.mulf %205, %243 : vector<8x1xf32>
      %261 = vector.shape_cast %245 : vector<1x128xi1> to vector<1x128xi1>
      %262 = vector.broadcast %261 : vector<1x128xi1> to vector<8x128xi1>
      %263 = vector.shape_cast %260 : vector<8x1xf32> to vector<8x1xf32>
      %264 = vector.broadcast %263 : vector<8x1xf32> to vector<8x128xf32>
      %265 = arith.select %262, %264, %151 : vector<8x128xi1>, vector<8x128xf32>
      %266 = arith.addf %arg9, %265 : vector<8x128xf32>
      %267 = arith.mulf %207, %243 : vector<8x1xf32>
      %268 = vector.shape_cast %245 : vector<1x128xi1> to vector<1x128xi1>
      %269 = vector.broadcast %268 : vector<1x128xi1> to vector<8x128xi1>
      %270 = vector.shape_cast %267 : vector<8x1xf32> to vector<8x1xf32>
      %271 = vector.broadcast %270 : vector<8x1xf32> to vector<8x128xf32>
      %272 = arith.select %269, %271, %151 : vector<8x128xi1>, vector<8x128xf32>
      %273 = arith.addf %arg10, %272 : vector<8x128xf32>
      %274 = arith.mulf %arg6, %243 : vector<8x1xf32>
      %275 = vector.shape_cast %245 : vector<1x128xi1> to vector<1x128xi1>
      %276 = vector.broadcast %275 : vector<1x128xi1> to vector<8x128xi1>
      %277 = vector.shape_cast %274 : vector<8x1xf32> to vector<8x1xf32>
      %278 = vector.broadcast %277 : vector<8x1xf32> to vector<8x128xf32>
      %279 = arith.select %276, %278, %151 : vector<8x128xi1>, vector<8x128xf32>
      %280 = arith.addf %arg11, %279 : vector<8x128xf32>
      %281 = arith.mulf %209, %243 : vector<8x1xf32>
      %282 = vector.shape_cast %245 : vector<1x128xi1> to vector<1x128xi1>
      %283 = vector.broadcast %282 : vector<1x128xi1> to vector<8x128xi1>
      %284 = vector.shape_cast %281 : vector<8x1xf32> to vector<8x1xf32>
      %285 = vector.broadcast %284 : vector<8x1xf32> to vector<8x128xf32>
      %286 = arith.select %283, %285, %151 : vector<8x128xi1>, vector<8x128xf32>
      %287 = arith.addf %arg12, %286 : vector<8x128xf32>
      %288 = vector.broadcast %184 : vector<8x1xi1> to vector<8x128xi1>
      %289 = arith.andi %288, %240 : vector<8x128xi1>
      %290 = arith.ori %192, %289 : vector<8x128xi1>
      %cst_98 = arith.constant -1.000000e+00 : f32
      %291 = vector.broadcast %cst_98 : f32 to vector<8x128xf32>
      %292 = arith.select %290, %291, %arg5 : vector<8x128xi1>, vector<8x128xf32>
      %cst_99 = arith.constant dense<0xFF800000> : vector<8xf32>
      %293 = vector.multi_reduction <maximumf>, %292, %cst_99 [1] : vector<8x128xf32> to vector<8xf32>
      %294 = vector.shape_cast %293 : vector<8xf32> to vector<8x1xf32>
      %295 = vector.shape_cast %294 : vector<8x1xf32> to vector<1x8x1xf32>
      %cst_100 = arith.constant dense<0xFF800000> : vector<1xf32>
      %296 = vector.multi_reduction <maximumf>, %295, %cst_100 [1, 2] : vector<1x8x1xf32> to vector<1xf32>
      %297 = vector.shape_cast %296 : vector<1xf32> to vector<1x1x1xf32>
      %298 = vector.extract %297[0, 0, 0] : f32 from vector<1x1x1xf32>
      %cst_101 = arith.constant 0.000000e+00 : f32
      %299 = arith.cmpf ogt, %298, %cst_101 : f32
      %c1_i32 = arith.constant 1 : i32
      %300 = arith.addi %arg3, %c1_i32 : i32
      scf.yield %300, %299, %292, %294, %252, %259, %266, %273, %280, %287 : i32, i1, vector<8x128xf32>, vector<8x1xf32>, vector<8x128xf32>, vector<8x128xf32>, vector<8x128xf32>, vector<8x128xf32>, vector<8x128xf32>, vector<8x128xf32>
    }
    %c0_69 = arith.constant 0 : index
    %c0_70 = arith.constant 0 : index
    %c0_71 = arith.constant 0 : index
    %165 = vector.load %arg2[%c0_69, %c0_70, %c0_71] : memref<6x8x128xf32, #tpu.memory_space<vmem>>, vector<1x8x128xf32>
    %166 = vector.shape_cast %165 : vector<1x8x128xf32> to vector<8x128xf32>
    %167 = vector.shape_cast %164#4 : vector<8x128xf32> to vector<1x8x128xf32>
    tpu.vector_store %arg2[%c0_69, %c0_70, %c0_71], %167 {strides = array<i32>} : memref<6x8x128xf32, #tpu.memory_space<vmem>>, vector<1x8x128xf32>,
    %c1_72 = arith.constant 1 : index
    %c0_73 = arith.constant 0 : index
    %c0_74 = arith.constant 0 : index
    %168 = vector.load %arg2[%c1_72, %c0_73, %c0_74] : memref<6x8x128xf32, #tpu.memory_space<vmem>>, vector<1x8x128xf32>
    %169 = vector.shape_cast %168 : vector<1x8x128xf32> to vector<8x128xf32>
    %170 = vector.shape_cast %164#5 : vector<8x128xf32> to vector<1x8x128xf32>
    tpu.vector_store %arg2[%c1_72, %c0_73, %c0_74], %170 {strides = array<i32>} : memref<6x8x128xf32, #tpu.memory_space<vmem>>, vector<1x8x128xf32>,
    %c2_75 = arith.constant 2 : index
    %c0_76 = arith.constant 0 : index
    %c0_77 = arith.constant 0 : index
    %171 = vector.load %arg2[%c2_75, %c0_76, %c0_77] : memref<6x8x128xf32, #tpu.memory_space<vmem>>, vector<1x8x128xf32>
    %172 = vector.shape_cast %171 : vector<1x8x128xf32> to vector<8x128xf32>
    %173 = vector.shape_cast %164#6 : vector<8x128xf32> to vector<1x8x128xf32>
    tpu.vector_store %arg2[%c2_75, %c0_76, %c0_77], %173 {strides = array<i32>} : memref<6x8x128xf32, #tpu.memory_space<vmem>>, vector<1x8x128xf32>,
    %c3_78 = arith.constant 3 : index
    %c0_79 = arith.constant 0 : index
    %c0_80 = arith.constant 0 : index
    %174 = vector.load %arg2[%c3_78, %c0_79, %c0_80] : memref<6x8x128xf32, #tpu.memory_space<vmem>>, vector<1x8x128xf32>
    %175 = vector.shape_cast %174 : vector<1x8x128xf32> to vector<8x128xf32>
    %176 = vector.shape_cast %164#7 : vector<8x128xf32> to vector<1x8x128xf32>
    tpu.vector_store %arg2[%c3_78, %c0_79, %c0_80], %176 {strides = array<i32>} : memref<6x8x128xf32, #tpu.memory_space<vmem>>, vector<1x8x128xf32>,
    %c4_81 = arith.constant 4 : index
    %c0_82 = arith.constant 0 : index
    %c0_83 = arith.constant 0 : index
    %177 = vector.load %arg2[%c4_81, %c0_82, %c0_83] : memref<6x8x128xf32, #tpu.memory_space<vmem>>, vector<1x8x128xf32>
    %178 = vector.shape_cast %177 : vector<1x8x128xf32> to vector<8x128xf32>
    %179 = vector.shape_cast %164#8 : vector<8x128xf32> to vector<1x8x128xf32>
    tpu.vector_store %arg2[%c4_81, %c0_82, %c0_83], %179 {strides = array<i32>} : memref<6x8x128xf32, #tpu.memory_space<vmem>>, vector<1x8x128xf32>,
    %c5_84 = arith.constant 5 : index
    %c0_85 = arith.constant 0 : index
    %c0_86 = arith.constant 0 : index
    %180 = vector.load %arg2[%c5_84, %c0_85, %c0_86] : memref<6x8x128xf32, #tpu.memory_space<vmem>>, vector<1x8x128xf32>
    %181 = vector.shape_cast %180 : vector<1x8x128xf32> to vector<8x128xf32>
    %182 = vector.shape_cast %164#9 : vector<8x128xf32> to vector<1x8x128xf32>
    tpu.vector_store %arg2[%c5_84, %c0_85, %c0_86], %182 {strides = array<i32>} : memref<6x8x128xf32, #tpu.memory_space<vmem>>, vector<1x8x128xf32>,
    return
  }
  func.func @transform_0(%arg0: i32) -> (i32, i32, i32) {
    %c0_i32 = arith.constant 0 : i32
    %c0_i32_0 = arith.constant 0 : i32
    %c0_i32_1 = arith.constant 0 : i32
    return %c0_i32, %arg0, %c0_i32_0 : i32, i32, i32
  }
  func.func @transform_1(%arg0: i32) -> (i32, i32, i32) {
    %c0_i32 = arith.constant 0 : i32
    %c0_i32_0 = arith.constant 0 : i32
    %c0_i32_1 = arith.constant 0 : i32
    return %c0_i32, %arg0, %c0_i32_0 : i32, i32, i32
  }
}

</mosaic_0001>

<llo_original>
// kernel: tpu_custom_call.1
$region0: #{tpu_custom_call.1}
  #allocation0 [shape = 'u32[]', space=smem, size = 0x4, offset = 0x4, fixed_abs, tag = 'smem constant byte address 0x4 - core index']
  #allocation1 [shape = 'u32[144,128]{1,0:T(1,128)}', space=vmem, size = 0x12000, scoped, tag = 'internal scratch']
  %s0 = inlined_call_operand.hbm [shape: f32[21,8,128], index: 0, kind: input, shape index: {}]
  %s1 = inlined_call_operand.hbm [shape: f32[6,8,128], index: 1, kind: output, shape index: {}]
  %s2 = sld [smem:[#allocation0]]
  $region25: #{tpu_custom_call.1} parent=0
    _
  %s4 = ssub.s32 1, %s2
  %s5 = scalar_select 0, %s4, %s2
  $region1: #{tpu_custom_call.1} parent=0
    #allocation2 [shape = 'u8[86016]{0}', space=vmem, size = 0x15000, scoped, tag = 'input window, operand 0, single buffered']
    #allocation3 [shape = 's32[1]{0}', space=sflag, size = 0x4, scoped, tag = 'scoped memory for tpu_custom_call.1']
    #allocation4 [shape = 's32[1]{0}', space=sflag, size = 0x4, scoped, tag = 'scoped memory for tpu_custom_call.1']
    #allocation5 [shape = 'u8[24576]{0}', space=vmem, size = 0x6000, scoped, tag = 'output window, operand 0, single buffered']
    %6 = vsyncpa [#allocation3], 0
    %7 = vsyncpa [#allocation4], 0
    // Predicated region
    $region2: #{tpu_custom_call.1} parent=1 // pred_check
      _
    $region3: #{tpu_custom_call.1} parent=1 // pred_check_branch
      %9 = sbr.rel (0) target = $region5
    $region4: #{tpu_custom_call.1} parent=1 // pred_region
      %s11 = ssub.s32 2688, 2688
      %12 = vsyncadd [#allocation3], %s11
      %s13 = sshll.u32 [#allocation2], 4
      %s14 = int_to_ptr.vmem [resolvable:$true] %s13
      %19 = dma.hbm_to_vmem [thread:$0]  %s0, 2688, %s14, [#allocation3], 128, 128, 8
    $region5: #{tpu_custom_call.1} parent=1 // pred_fallthru
      _
    // Predicated region
    $region6: #{tpu_custom_call.1} parent=1 // pred_check
      _
    $region7: #{tpu_custom_call.1} parent=1 // pred_check_branch
      %21 = sbr.rel (0) target = $region9
    $region8: #{tpu_custom_call.1} parent=1 // pred_region
      %22 = dma.done [#allocation3], 2688
    $region9: #{tpu_custom_call.1} parent=1 // pred_fallthru
      _
    %v23 = vld [vmem:[#allocation2] sm:$0xff]
    %s24 = scalar_lea.vmem [#allocation2], 8
    %v25 = vld [vmem:[%s24] sm:$0xff]
    %s26 = scalar_lea.vmem [#allocation2], 16
    %v27 = vld [vmem:[%s26] sm:$0xff]
    %s28 = scalar_lea.vmem [#allocation2], 24
    %v29 = vld [vmem:[%s28] sm:$0xff]
    %s30 = scalar_lea.vmem [#allocation2], 32
    %v31 = vld [vmem:[%s30] sm:$0xff]
    %s32 = scalar_lea.vmem [#allocation2], 40
    %v33 = vld [vmem:[%s32] sm:$0xff]
    %v34 = vmul.f32 %v33, %v31
    %s35 = scalar_lea.vmem [#allocation2], 48
    %v36 = vld [vmem:[%s35] sm:$0xff]
    %v37 = vmul.f32 %v36, %v31
    %vm38 = vcmp.gt.f32.partialorder %v37, %v34
    %v39 = vsel %vm38, 1.0, 0.0
    %v40 = vsel %vm38, %v37, %v34
    %s41 = scalar_lea.vmem [#allocation2], 56
    %v42 = vld [vmem:[%s41] sm:$0xff]
    %v43 = vmul.f32 %v42, %v31
    %vm44 = vcmp.gt.f32.partialorder %v43, %v40
    %v45 = vsel %vm44, 2.0, %v39
    %v46 = vsel %vm44, %v43, %v40
    %s47 = scalar_lea.vmem [#allocation2], 64
    %v48 = vld [vmem:[%s47] sm:$0xff]
    %v49 = vmul.f32 %v48, %v31
    %vm50 = vcmp.gt.f32.partialorder %v49, %v46
    %v51 = vsel %vm50, 3.0, %v45
    %v52 = vsel %vm50, %v49, %v46
    %s53 = scalar_lea.vmem [#allocation2], 72
    %v54 = vld [vmem:[%s53] sm:$0xff]
    %v55 = vmul.f32 %v54, %v31
    %vm56 = vcmp.gt.f32.partialorder %v55, %v52
    %v57 = vsel %vm56, 4.0, %v51
    %v58 = vsel %vm56, %v55, %v52
    %s59 = scalar_lea.vmem [#allocation2], 80
    %v60 = vld [vmem:[%s59] sm:$0xff]
    %v61 = vmul.f32 %v60, %v31
    %vm62 = vcmp.gt.f32.partialorder %v61, %v58
    %v63 = vsel %vm62, 5.0, %v57
    %v64 = vsel %vm62, %v61, %v58
    %s65 = scalar_lea.vmem [#allocation2], 88
    %v66 = vld [vmem:[%s65] sm:$0xff]
    %v67 = vmul.f32 %v66, %v31
    %vm68 = vcmp.gt.f32.partialorder %v67, %v64
    %v69 = vsel %vm68, 6.0, %v63
    %v70 = vsel %vm68, %v67, %v64
    %s71 = scalar_lea.vmem [#allocation2], 96
    %v72 = vld [vmem:[%s71] sm:$0xff]
    %v73 = vmul.f32 %v72, %v31
    %vm74 = vcmp.gt.f32.partialorder %v73, %v70
    %v75 = vsel %vm74, 7.0, %v69
    %v76 = vsel %vm74, %v73, %v70
    %s77 = scalar_lea.vmem [#allocation2], 104
    %v78 = vld [vmem:[%s77] sm:$0xff]
    %v79 = vmul.f32 %v78, %v31
    %vm80 = vcmp.gt.f32.partialorder %v79, %v76
    %v81 = vsel %vm80, 8.0, %v75
    %v82 = vsel %vm80, %v79, %v76
    %s83 = scalar_lea.vmem [#allocation2], 112
    %v84 = vld [vmem:[%s83] sm:$0xff]
    %v85 = vmul.f32 %v84, %v31
    %vm86 = vcmp.gt.f32.partialorder %v85, %v82
    %v87 = vsel %vm86, 9.0, %v81
    %v88 = vsel %vm86, %v85, %v82
    %s89 = scalar_lea.vmem [#allocation2], 120
    %v90 = vld [vmem:[%s89] sm:$0xff]
    %v91 = vmul.f32 %v90, %v31
    %vm92 = vcmp.gt.f32.partialorder %v91, %v88
    %v93 = vsel %vm92, 10.0, %v87
    %v94 = vsel %vm92, %v91, %v88
    %s95 = scalar_lea.vmem [#allocation2], 128
    %v96 = vld [vmem:[%s95] sm:$0xff]
    %v97 = vmul.f32 %v96, %v31
    %vm98 = vcmp.gt.f32.partialorder %v97, %v94
    %v99 = vsel %vm98, 11.0, %v93
    %v100 = vsel %vm98, %v97, %v94
    %s101 = scalar_lea.vmem [#allocation2], 136
    %v102 = vld [vmem:[%s101] sm:$0xff]
    %v103 = vmul.f32 %v102, %v31
    %vm104 = vcmp.gt.f32.partialorder %v103, %v100
    %v105 = vsel %vm104, 12.0, %v99
    %v106 = vsel %vm104, %v103, %v100
    %s107 = scalar_lea.vmem [#allocation2], 144
    %v108 = vld [vmem:[%s107] sm:$0xff]
    %v109 = vmul.f32 %v108, %v31
    %vm110 = vcmp.gt.f32.partialorder %v109, %v106
    %v111 = vsel %vm110, 13.0, %v105
    %v112 = vsel %vm110, %v109, %v106
    %s113 = scalar_lea.vmem [#allocation2], 152
    %v114 = vld [vmem:[%s113] sm:$0xff]
    %v115 = vmul.f32 %v114, %v31
    %vm116 = vcmp.gt.f32.partialorder %v115, %v112
    %v117 = vsel %vm116, 14.0, %v111
    %v118 = vsel %vm116, %v115, %v112
    %s119 = scalar_lea.vmem [#allocation2], 160
    %v120 = vld [vmem:[%s119] sm:$0xff]
    %v121 = vmul.f32 %v120, %v31
    %vm122 = vcmp.gt.f32.partialorder %v121, %v118
    %v123 = vsel %vm122, 15.0, %v117
    %v124 = vsel %vm122, %v121, %v118
    %v125 = vmul.f32 %v27, 0.5
    %v126 = vsub.f32 %v23, %v125
    %v127 = vmul.f32 %v29, 0.5
    %v128 = vsub.f32 %v25, %v127
    %v129 = vadd.f32 %v23, %v125
    %v130 = vadd.f32 %v25, %v127
    %v131 = vmul.f32 %v123, 4096.0
    %v132 = vadd.f32 %v126, %v131
    %v133 = vadd.f32 %v128, %v131
    %v134 = vadd.f32 %v129, %v131
    %v135 = vadd.f32 %v130, %v131
    %v136 = vsub.f32 %v134, %v132
    %v137 = vsub.f32 %v135, %v133
    %v138 = vmul.f32 %v136, %v137
    %vm139 = vcmp.gt.f32.partialorder %v31, 0.25
    %vm140 = vcmp.gt.f32.partialorder %v124, 0.25
    %vm141 = vmand %vm139, %vm140
    %v142 = vsel %vm141, %v124, -1.0
    %143 = vmax.xlane.f32.xlu0 %v142
    %v144 = vpop.xlane.xlu0 %143
    %v145 = vlaneseq
    %v146 = vand.u32 %v145, 127
    %v147 = vrot.slane %v144, 4
    %v148 = vmax.f32 %v144, %v147
    %v149 = vrot.slane %v148, 2
    %v150 = vmax.f32 %v148, %v149
    %v151 = vrot.slane %v150, 1
    %v152 = vmax.f32 %v150, %v151
    %s153 = vtos %v152
    %p154 = scmp.gt.f32.partialorder %s153, 0.0
    // While loop
    $region10: #{tpu_custom_call.1} parent=1 // loop_pre_header
      _
    $region11: #{tpu_custom_call.1} parent=1 // loop_header
      %s156 = sphi 0, %s266
      %p157 = pphi %p154, %p265
      %v158 = vphi %v142, %v255
      %v159 = vphi %v144, %v257
      %v160 = vphi 0.0, %v235
      %v161 = vphi 0.0, %v238
      %v162 = vphi 0.0, %v241
      %v163 = vphi 0.0, %v244
      %v164 = vphi 0.0, %v247
      %v165 = vphi 0.0, %v250
      %p166 = scmp.lt.s32.totalorder %s156, 128
      %p167 = pnand %p166, %p157
      %p168 = pneg %p167
    $region12: #{tpu_custom_call.1} parent=1 // loop_header_branch
      %170 = sbr.rel (%p167) target = $region16
    $region13: #{tpu_custom_call.1} parent=1 // loop_body
      %vm171 = vcmp.gt.f32.partialorder %v159, 0.0
      %vm172 = vcmp.ge.f32.partialorder %v158, %v159
      %v173 = vsel %vm172, %v146, 128
      %v174 = vand.u32 %v173, 65535
      %v175 = vshra.s32 %v173, 16
      %v176 = vcvt.s32.f32 %v174
      %v177 = vcvt.s32.f32 %v175
      %178 = vmin.xlane.f32.xlu0 %v177
      %v179 = vpop.xlane.xlu0 %178
      %vm180 = vcmp.eq.f32.partialorder %v177, %v179
      %v181 = vsel %vm180, %v176, inf
      %182 = vmin.xlane.f32.xlu0 %v181
      %v183 = vpop.xlane.xlu0 %182
      %v184 = vcvt.f32.s32 %v183
      %v185 = vcvt.f32.s32 %v179
      %v186 = vshll.u32 %v185, 16
      %v187 = vadd.s32 %v186, %v184
      %vm188 = vcmp.eq.s32.totalorder %v146, %v187
      %v189 = vsel %vm188, 1, 0
      %vm190 = vcmp.eq.s32.totalorder %v189, 1
      %v191 = vsel %vm190, %v126, 0.0
      %v192 = vsel %vm190, %v128, 0.0
      %v193 = vsel %vm190, %v129, 0.0
      %v194 = vsel %vm190, %v130, 0.0
      %v195 = vsel %vm190, %v123, 0.0
      %v196 = vsel %vm190, %v138, 0.0
      %197 = vadd.xlane.f32.xlu0 %v191
      %v198 = vpop.xlane.xlu0 %197
      %199 = vadd.xlane.f32.xlu0 %v192
      %v200 = vpop.xlane.xlu0 %199
      %201 = vadd.xlane.f32.xlu0 %v193
      %v202 = vpop.xlane.xlu0 %201
      %203 = vadd.xlane.f32.xlu0 %v194
      %v204 = vpop.xlane.xlu0 %203
      %205 = vadd.xlane.f32.xlu0 %v195
      %v206 = vpop.xlane.xlu0 %205
      %207 = vadd.xlane.f32.xlu0 %v196
      %v208 = vpop.xlane.xlu0 %207
      %v209 = vmul.f32 %v206, 4096.0
      %v210 = vadd.f32 %v198, %v209
      %v211 = vadd.f32 %v200, %v209
      %v212 = vadd.f32 %v202, %v209
      %v213 = vadd.f32 %v204, %v209
      %v214 = vmin.f32 %v134, %v212
      %v215 = vmax.f32 %v132, %v210
      %v216 = vsub.f32 %v214, %v215
      %v217 = vmax.f32 %v216, 0.0
      %v218 = vmin.f32 %v135, %v213
      %v219 = vmax.f32 %v133, %v211
      %v220 = vsub.f32 %v218, %v219
      %v221 = vmax.f32 %v220, 0.0
      %v222 = vmul.f32 %v217, %v221
      %v223 = vadd.f32 %v138, %v208
      %v224 = vsub.f32 %v223, %v222
      %v225 = vadd.f32 %v224, 1e-09
      %v226 = vmul.f32 %v225, 0.45
      %vm227 = vcmp.gt.f32.partialorder %v222, %v226
      %v228 = vsel %vm171, 1.0, 0.0
      %v229 = vstv %s156
      %vm230 = vcmp.eq.s32.totalorder %v146, %v229
      %v231 = vmul.f32 %v198, %v228
      %v232 = vsel %vm230, 1, 0
      %vm233 = vcmp.eq.s32.totalorder %v232, 1
      %v234 = vsel %vm233, %v231, 0.0
      %v235 = vadd.f32 %v160, %v234
      %v236 = vmul.f32 %v200, %v228
      %v237 = vsel %vm233, %v236, 0.0
      %v238 = vadd.f32 %v161, %v237
      %v239 = vmul.f32 %v202, %v228
      %v240 = vsel %vm233, %v239, 0.0
      %v241 = vadd.f32 %v162, %v240
      %v242 = vmul.f32 %v204, %v228
      %v243 = vsel %vm233, %v242, 0.0
      %v244 = vadd.f32 %v163, %v243
      %v245 = vmul.f32 %v159, %v228
      %v246 = vsel %vm233, %v245, 0.0
      %v247 = vadd.f32 %v164, %v246
      %v248 = vmul.f32 %v206, %v228
      %v249 = vsel %vm233, %v248, 0.0
      %v250 = vadd.f32 %v165, %v249
      %v251 = vsel %vm171, 1, 0
      %vm252 = vcmp.eq.s32.totalorder %v251, 1
      %vm253 = vmand %vm252, %vm227
      %vm254 = vmor %vm188, %vm253
      %v255 = vsel %vm254, -1.0, %v158
      %256 = vmax.xlane.f32.xlu0 %v255
      %v257 = vpop.xlane.xlu0 %256
      %v258 = vrot.slane %v257, 4
      %v259 = vmax.f32 %v257, %v258
      %v260 = vrot.slane %v259, 2
      %v261 = vmax.f32 %v259, %v260
      %v262 = vrot.slane %v261, 1
      %v263 = vmax.f32 %v261, %v262
      %s264 = vtos %v263
      %p265 = scmp.gt.f32.partialorder %s264, 0.0
      %s266 = sadd.s32 %s156, 1
    $region14: #{tpu_custom_call.1} parent=1 // loop_footer
      _
    $region15: #{tpu_custom_call.1} parent=1 // loop_footer_branch
      %155 = sbr.rel target = $region11
    $region16: #{tpu_custom_call.1} parent=1 // loop_exit
      _
    %267 = vst [vmem:[#allocation5] sm:$0xff] %v160
    %s268 = scalar_lea.vmem [#allocation5], 8
    %269 = vst [vmem:[%s268] sm:$0xff] %v161
    %s270 = scalar_lea.vmem [#allocation5], 16
    %271 = vst [vmem:[%s270] sm:$0xff] %v162
    %s272 = scalar_lea.vmem [#allocation5], 24
    %273 = vst [vmem:[%s272] sm:$0xff] %v163
    %s274 = scalar_lea.vmem [#allocation5], 32
    %275 = vst [vmem:[%s274] sm:$0xff] %v164
    %s276 = scalar_lea.vmem [#allocation5], 40
    %277 = vst [vmem:[%s276] sm:$0xff] %v165
    // Predicated region
    $region17: #{tpu_custom_call.1} parent=1 // pred_check
      _
    $region18: #{tpu_custom_call.1} parent=1 // pred_check_branch
      %279 = sbr.rel (0) target = $region20
    $region19: #{tpu_custom_call.1} parent=1 // pred_region
      %s281 = ssub.s32 768, 768
      %282 = vsyncadd [#allocation4], %s281
      %s283 = sshll.u32 [#allocation5], 4
      %s284 = int_to_ptr.vmem [resolvable:$true] %s283
      %289 = dma.vmem_to_hbm [thread:$0]  %s284, 768, %s1, [#allocation4], 128, 128, 8
    $region20: #{tpu_custom_call.1} parent=1 // pred_fallthru
      _
    // Predicated region
    $region21: #{tpu_custom_call.1} parent=1 // pred_check
      _
    $region22: #{tpu_custom_call.1} parent=1 // pred_check_branch
      %291 = sbr.rel (0) target = $region24
    $region23: #{tpu_custom_call.1} parent=1 // pred_region
      %292 = dma.done [#allocation4], 768
    $region24: #{tpu_custom_call.1} parent=1 // pred_fallthru
      _
    %293 = vsyncpa [#allocation3], 1
    %294 = vsyncpa [#allocation4], 1

</llo_original>
